<compile_context>
chip_gen: v7x
topology: tpu7x:2x2x1
jax: 0.10.0
libtpu: 0.0.40
codegen_flags: <defaults>
</compile_context>

<pallas_src>
import functools
import math

import jax
import jax.numpy as jnp
from jax.experimental import pallas as pl
from jax.experimental.pallas import tpu as pltpu


def _round_up(x, m):
    return (x + m - 1) // m * m


def csse_kernel(x_ref, w_sq_ref, w_ex_ref, w_sse_ref, o_ref, *, inv_hw):
    # x_ref: (BT, C, HWp) float32 slab covering BT batch elements.
    x = x_ref[...]

    # ---- cSE branch: global average pool + squeeze/excite, batched over BT ----
    # Padded spatial lanes are zero, so sum * (1/HW_true) equals the true mean.
    z = jnp.sum(x, axis=2) * inv_hw                                  # (BT, C)
    s = jnp.einsum("bc,oc->bo", z, w_sq_ref[...],
                   preferred_element_type=jnp.float32)               # (BT, C//2)
    e = jnp.einsum("bh,oh->bo", s, w_ex_ref[...],
                   preferred_element_type=jnp.float32)               # (BT, C)
    gate_c = jax.nn.sigmoid(e)[:, :, None]                           # (BT, C, 1)

    # ---- sSE branch: 1x1 conv (C -> 1) on the VPU: broadcast-mul + channel sum ----
    w_s = w_sse_ref[...][:, :, None]                                 # (1, C, 1)
    q = jax.nn.sigmoid(jnp.sum(w_s * x, axis=1, keepdims=True))      # (BT, 1, HWp)

    # ---- combine: U * (gate_c + q)  (factored: one add + one mul on the slab) ----
    o_ref[...] = x * (gate_c + q)


def csse_pallas(U, w_sq, w_ex, w_sse, *, block_bytes=1 << 20):
    """U: (N, C, H, W) float32.  Weights (1x1 conv kernels flattened to 2D):
       w_sq:  (C//2, C)   -- Conv_Squeeze    (out, in)
       w_ex:  (C, C//2)   -- Conv_Excitation (out, in)
       w_sse: (1, C)      -- sSE Conv1x1     (out, in)
    """
    N, C, H, W = U.shape
    HW = H * W
    HWp = _round_up(HW, 128)                 # lane-dense last dim

    # Pick a batch tile: ~block_bytes per array per grid step, capped at N,
    # preferring B_TILE*C to be a multiple of 8 so vreg sublanes are full.
    per_n_bytes = C * HWp * 4
    bt = max(1, min(N, block_bytes // per_n_bytes))
    if (bt * C) % 8 and bt < N:
        mult = 8 // math.gcd(C, 8)
        bt = min(_round_up(bt, mult), N)
    Np = _round_up(N, bt)

    x = U.reshape(N, C, HW).astype(jnp.float32)
    if Np != N or HWp != HW:
        x = jnp.pad(x, ((0, Np - N), (0, 0), (0, HWp - HW)))

    w_sq = w_sq.astype(jnp.float32)
    w_ex = w_ex.astype(jnp.float32)
    w_sse = w_sse.astype(jnp.float32)

    kernel = functools.partial(csse_kernel, inv_hw=1.0 / HW)

    out = pl.pallas_call(
        kernel,
        out_shape=jax.ShapeDtypeStruct((Np, C, HWp), jnp.float32),
        grid_spec=pltpu.PrefetchScalarGridSpec(
            num_scalar_prefetch=0,
            grid=(Np // bt,),
            in_specs=[
                pl.BlockSpec((bt, C, HWp), lambda n: (n, 0, 0)),   # batch tile
                pl.BlockSpec((C // 2, C), lambda n: (0, 0)),       # w_sq (full)
                pl.BlockSpec((C, C // 2), lambda n: (0, 0)),       # w_ex (full)
                pl.BlockSpec((1, C), lambda n: (0, 0)),            # w_sse (full)
            ],
            out_specs=pl.BlockSpec((bt, C, HWp), lambda n: (n, 0, 0)),
        ),
        compiler_params=pltpu.CompilerParams(
            dimension_semantics=("parallel",)),
    )(x, w_sq, w_ex, w_sse)

    return out[:N, :, :HW].reshape(N, C, H, W)


def csse_ref(U, w_sq, w_ex, w_sse):
    """Pure-JAX reference matching the PyTorch forward (bias=False convs)."""
    # sSE
    q = jax.nn.sigmoid(jnp.einsum("oc,nchw->nohw", w_sse, U))          # (N,1,H,W)
    U_sse = U * q
    # cSE
    z = jnp.mean(U, axis=(2, 3))                                       # (N,C)
    s = jnp.einsum("oc,nc->no", w_sq, z)                               # (N,C//2)
    e = jnp.einsum("oc,nc->no", w_ex, s)                               # (N,C)
    gate = jax.nn.sigmoid(e)[:, :, None, None]                         # (N,C,1,1)
    U_cse = U * gate
    return U_cse + U_sse


if __name__ == "__main__":
    key = jax.random.PRNGKey(0)
    k_u, k1, k2, k3, k_u2 = jax.random.split(key, 5)

    # Primary small shape consistent with the module.
    N, C, H, W = 2, 4, 16, 16
    U = jax.random.normal(k_u, (N, C, H, W), dtype=jnp.float32)
    w_sq = jax.random.normal(k1, (C // 2, C), dtype=jnp.float32) * 0.5   # Conv_Squeeze
    w_ex = jax.random.normal(k2, (C, C // 2), dtype=jnp.float32) * 0.5   # Conv_Excitation
    w_sse = jax.random.normal(k3, (1, C), dtype=jnp.float32) * 0.5       # sSE Conv1x1

    out = jax.block_until_ready(csse_pallas(U, w_sq, w_ex, w_sse))
    ref = csse_ref(U, w_sq, w_ex, w_sse)
    assert out.shape == (N, C, H, W)
    assert jnp.allclose(out, ref, atol=1e-5, rtol=1e-5), "mismatch vs reference"

    # Second shape exercising the batch / lane padding path (HW=196 -> 256).
    N2, H2, W2 = 3, 14, 14
    U2 = jax.random.normal(k_u2, (N2, C, H2, W2), dtype=jnp.float32)
    out2 = jax.block_until_ready(csse_pallas(U2, w_sq, w_ex, w_sse))
    ref2 = csse_ref(U2, w_sq, w_ex, w_sse)
    assert out2.shape == (N2, C, H2, W2)
    assert jnp.allclose(out2, ref2, atol=1e-5, rtol=1e-5), "mismatch vs reference (padded)"

    print("KERNEL_OK")
</pallas_src>

<mosaic_0001>
module attributes {stable_mosaic.version = 11 : i64} {
  func.func @csse_kernel(%arg0: i32, %arg1: memref<2x4x256xf32, #tpu.memory_space<vmem>>, %arg2: memref<2x4xf32, #tpu.memory_space<vmem>>, %arg3: memref<4x2xf32, #tpu.memory_space<vmem>>, %arg4: memref<1x4xf32, #tpu.memory_space<vmem>>, %arg5: memref<2x4x256xf32, #tpu.memory_space<vmem>>) attributes {dimension_semantics = [#tpu.dimension_semantics<parallel>], iteration_bounds = array<i64: 1>, scalar_prefetch = 0 : i64, scratch_operands = 0 : i64, tpu.core_type = #tpu.core_type<tc>, window_params = [{transform_indices = @transform_0, window_bounds = array<i64: 2, 4, 256>}, {pipeline_mode = #tpu.pipeline_mode<synchronous>, transform_indices = @transform_1, window_bounds = array<i64: 2, 4>}, {pipeline_mode = #tpu.pipeline_mode<synchronous>, transform_indices = @transform_2, window_bounds = array<i64: 4, 2>}, {pipeline_mode = #tpu.pipeline_mode<synchronous>, transform_indices = @transform_3, window_bounds = array<i64: 1, 4>}, {transform_indices = @transform_4, window_bounds = array<i64: 2, 4, 256>}]} {
    %c0 = arith.constant 0 : index
    %c0_0 = arith.constant 0 : index
    %c0_1 = arith.constant 0 : index
    %0 = vector.load %arg1[%c0, %c0_0, %c0_1] : memref<2x4x256xf32, #tpu.memory_space<vmem>>, vector<2x4x256xf32>
    %cst = arith.constant dense<0.000000e+00> : vector<2x4xf32>
    %1 = vector.multi_reduction <add>, %0, %cst [2] : vector<2x4x256xf32> to vector<2x4xf32>
    %cst_2 = arith.constant 3.906250e-03 : f32
    %2 = vector.broadcast %cst_2 : f32 to vector<2x4xf32>
    %3 = arith.mulf %1, %2 : vector<2x4xf32>
    %c0_3 = arith.constant 0 : index
    %c0_4 = arith.constant 0 : index
    %4 = vector.load %arg2[%c0_3, %c0_4] : memref<2x4xf32, #tpu.memory_space<vmem>>, vector<2x4xf32>
    "tpu.trace_start"() <{level = 10 : i32, message = "bc,oc->bo"}> : () -> ()
    %cst_5 = arith.constant dense<0.000000e+00> : vector<2x2xf32>
    %5 = tpu.matmul %3, %4, %cst_5 {dimension_numbers = #tpu.dot_dimension_numbers<[1], [1], [0], [0], [0, 0, 1, 0], [], []>} : vector<2x4xf32>, vector<2x4xf32>, vector<2x2xf32> -> vector<2x2xf32>
    "tpu.trace_stop"() : () -> ()
    %c0_6 = arith.constant 0 : index
    %c0_7 = arith.constant 0 : index
    %6 = vector.load %arg3[%c0_6, %c0_7] : memref<4x2xf32, #tpu.memory_space<vmem>>, vector<4x2xf32>
    "tpu.trace_start"() <{level = 10 : i32, message = "bh,oh->bo"}> : () -> ()
    %cst_8 = arith.constant dense<0.000000e+00> : vector<2x4xf32>
    %7 = tpu.matmul %5, %6, %cst_8 {dimension_numbers = #tpu.dot_dimension_numbers<[1], [1], [0], [0], [0, 0, 1, 0], [], []>} : vector<2x2xf32>, vector<4x2xf32>, vector<2x4xf32> -> vector<2x4xf32>
    "tpu.trace_stop"() : () -> ()
    %8 = arith.negf %7 : vector<2x4xf32>
    %9 = math.exp %8 : vector<2x4xf32>
    %cst_9 = arith.constant 1.000000e+00 : f32
    %10 = vector.broadcast %cst_9 : f32 to vector<2x4xf32>
    %11 = arith.addf %10, %9 : vector<2x4xf32>
    %12 = arith.divf %10, %11 : vector<2x4xf32>
    %13 = vector.shape_cast %12 : vector<2x4xf32> to vector<2x4x1xf32>
    %c0_10 = arith.constant 0 : index
    %c0_11 = arith.constant 0 : index
    %14 = vector.load %arg4[%c0_10, %c0_11] : memref<1x4xf32, #tpu.memory_space<vmem>>, vector<1x4xf32>
    %15 = vector.shape_cast %14 : vector<1x4xf32> to vector<1x4x1xf32>
    %16 = vector.broadcast %15 : vector<1x4x1xf32> to vector<2x4x256xf32>
    %17 = arith.mulf %16, %0 : vector<2x4x256xf32>
    %cst_12 = arith.constant dense<0.000000e+00> : vector<2x256xf32>
    %18 = vector.multi_reduction <add>, %17, %cst_12 [1] : vector<2x4x256xf32> to vector<2x256xf32>
    %19 = vector.shape_cast %18 : vector<2x256xf32> to vector<2x1x256xf32>
    %20 = arith.negf %19 : vector<2x1x256xf32>
    %21 = math.exp %20 : vector<2x1x256xf32>
    %cst_13 = arith.constant 1.000000e+00 : f32
    %22 = vector.broadcast %cst_13 : f32 to vector<2x1x256xf32>
    %23 = arith.addf %22, %21 : vector<2x1x256xf32>
    %24 = arith.divf %22, %23 : vector<2x1x256xf32>
    %25 = vector.broadcast %13 : vector<2x4x1xf32> to vector<2x4x256xf32>
    %26 = vector.broadcast %24 : vector<2x1x256xf32> to vector<2x4x256xf32>
    %27 = arith.addf %25, %26 : vector<2x4x256xf32>
    %28 = arith.mulf %0, %27 : vector<2x4x256xf32>
    %c0_14 = arith.constant 0 : index
    %c0_15 = arith.constant 0 : index
    %c0_16 = arith.constant 0 : index
    %29 = vector.load %arg5[%c0_14, %c0_15, %c0_16] : memref<2x4x256xf32, #tpu.memory_space<vmem>>, vector<2x4x256xf32>
    tpu.vector_store %arg5[%c0_14, %c0_15, %c0_16], %28 {strides = array<i32>} : memref<2x4x256xf32, #tpu.memory_space<vmem>>, vector<2x4x256xf32>,
    return
  }
  func.func @transform_0(%arg0: i32) -> (i32, i32, i32) {
    %c0_i32 = arith.constant 0 : i32
    %c0_i32_0 = arith.constant 0 : i32
    %c0_i32_1 = arith.constant 0 : i32
    return %arg0, %c0_i32, %c0_i32_0 : i32, i32, i32
  }
  func.func @transform_1(%arg0: i32) -> (i32, i32) {
    %c0_i32 = arith.constant 0 : i32
    %c0_i32_0 = arith.constant 0 : i32
    %c0_i32_1 = arith.constant 0 : i32
    return %c0_i32, %c0_i32_0 : i32, i32
  }
  func.func @transform_2(%arg0: i32) -> (i32, i32) {
    %c0_i32 = arith.constant 0 : i32
    %c0_i32_0 = arith.constant 0 : i32
    %c0_i32_1 = arith.constant 0 : i32
    return %c0_i32, %c0_i32_0 : i32, i32
  }
  func.func @transform_3(%arg0: i32) -> (i32, i32) {
    %c0_i32 = arith.constant 0 : i32
    %c0_i32_0 = arith.constant 0 : i32
    %c0_i32_1 = arith.constant 0 : i32
    return %c0_i32, %c0_i32_0 : i32, i32
  }
  func.func @transform_4(%arg0: i32) -> (i32, i32, i32) {
    %c0_i32 = arith.constant 0 : i32
    %c0_i32_0 = arith.constant 0 : i32
    %c0_i32_1 = arith.constant 0 : i32
    return %arg0, %c0_i32, %c0_i32_0 : i32, i32, i32
  }
}

</mosaic_0001>

<llo_original>
// kernel: tpu_custom_call.1
$region0: #{tpu_custom_call.1}
  #allocation0 [shape = 'u32[]', space=smem, size = 0x4, offset = 0x4, fixed_abs, tag = 'smem constant byte address 0x4 - core index']
  #allocation1 [shape = 'u32[144,128]{1,0:T(1,128)}', space=vmem, size = 0x12000, scoped, tag = 'internal scratch']
  %s0 = inlined_call_operand.hbm [shape: f32[2,4,256], index: 0, kind: input, shape index: {}]
  %s1 = inlined_call_operand.vmem [shape: f32[2,4], index: 1, kind: input, shape index: {}]
  %s2 = inlined_call_operand.vmem [shape: f32[4,2], index: 2, kind: input, shape index: {}]
  %s3 = inlined_call_operand.vmem [shape: f32[1,4], index: 3, kind: input, shape index: {}]
  %s4 = inlined_call_operand.hbm [shape: f32[2,4,256], index: 4, kind: output, shape index: {}]
  %s5 = sld [smem:[#allocation0]]
  $region30: #{tpu_custom_call.1} parent=0
    _
  %s7 = ssub.s32 1, %s5
  %s8 = scalar_select 0, %s7, %s5
  $region1: #{tpu_custom_call.1} parent=0
    #allocation2 [shape = 'u8[8192]{0}', space=vmem, size = 0x2000, scoped, tag = 'input window, operand 0, single buffered']
    #allocation3 [shape = 's32[1]{0}', space=sflag, size = 0x4, scoped, tag = 'scoped memory for tpu_custom_call.1']
    #allocation4 [shape = 's32[1]{0}', space=sflag, size = 0x4, scoped, tag = 'scoped memory for tpu_custom_call.1']
    #allocation5 [shape = 'u8[8192]{0}', space=vmem, size = 0x2000, scoped, tag = 'output window, operand 0, single buffered']
    %9 = vsyncpa [#allocation3], 0
    %10 = vsyncpa [#allocation4], 0
    // Predicated region
    $region2: #{tpu_custom_call.1} parent=1 // pred_check
      _
    $region3: #{tpu_custom_call.1} parent=1 // pred_check_branch
      %12 = sbr.rel (0) target = $region5
    $region4: #{tpu_custom_call.1} parent=1 // pred_region
      %s14 = ssub.s32 256, 256
      %15 = vsyncadd [#allocation3], %s14
      %s16 = sshll.u32 [#allocation2], 4
      %s17 = int_to_ptr.vmem [resolvable:$true] %s16
      %22 = dma.hbm_to_vmem [thread:$0]  %s0, 256, %s17, [#allocation3], 128, 128, 8
    $region5: #{tpu_custom_call.1} parent=1 // pred_fallthru
      _
    // Predicated region
    $region6: #{tpu_custom_call.1} parent=1 // pred_check
      _
    $region7: #{tpu_custom_call.1} parent=1 // pred_check_branch
      %24 = sbr.rel (0) target = $region9
    $region8: #{tpu_custom_call.1} parent=1 // pred_region
      _
    $region9: #{tpu_custom_call.1} parent=1 // pred_fallthru
      _
    // Predicated region
    $region10: #{tpu_custom_call.1} parent=1 // pred_check
      _
    $region11: #{tpu_custom_call.1} parent=1 // pred_check_branch
      %26 = sbr.rel (0) target = $region13
    $region12: #{tpu_custom_call.1} parent=1 // pred_region
      _
    $region13: #{tpu_custom_call.1} parent=1 // pred_fallthru
      _
    // Predicated region
    $region14: #{tpu_custom_call.1} parent=1 // pred_check
      _
    $region15: #{tpu_custom_call.1} parent=1 // pred_check_branch
      %28 = sbr.rel (0) target = $region17
    $region16: #{tpu_custom_call.1} parent=1 // pred_region
      _
    $region17: #{tpu_custom_call.1} parent=1 // pred_fallthru
      _
    // Predicated region
    $region18: #{tpu_custom_call.1} parent=1 // pred_check
      _
    $region19: #{tpu_custom_call.1} parent=1 // pred_check_branch
      %30 = sbr.rel (0) target = $region21
    $region20: #{tpu_custom_call.1} parent=1 // pred_region
      %31 = dma.done [#allocation3], 256
    $region21: #{tpu_custom_call.1} parent=1 // pred_fallthru
      _
    %v32 = vld [vmem:[#allocation2] sm:$0xff]
    %v33 = vld [vmem:[#allocation2 + $0x8] sm:$0xff]
    %v36 = vcombine.high %v32, %v32
    %v37 = vcombine.high %v33, %v33
    %vm40 = vcmask 1043456
    %v41 = vsel %vm40, %v32, 0.0
    %v42 = vsel %vm40, %v36, 0.0
    %v43 = vadd.f32 %v41, %v42
    %44 = vadd.xlane.f32.xlu0 %v43
    %v45 = vpop.xlane.xlu0 %44
    %v46 = vsel %vm40, %v33, 0.0
    %v47 = vsel %vm40, %v37, 0.0
    %v48 = vadd.f32 %v46, %v47
    %49 = vadd.xlane.f32.xlu0 %v48
    %v50 = vpop.xlane.xlu0 %49
    %v51 = vmul.f32 %v45, 0.00390625
    %v52 = vmul.f32 %v50, 0.00390625
    %v53 = vld [vmem:[%s1] sm:$0x3]
    %v56 = vlaneseq
    %v57 = vand.u32 %v56, 127
    %v58 = vlaneseq
    %v59 = vshrl.u32 %v58, 7
    %v60 = vsub.s32 %v57, %v59
    %v61 = vrot.slane %v51, %v60
    %v62 = vlaneseq
    %v63 = vshrl.u32 %v62, 7
    %v64 = vsub.s32 %v57, %v63
    %v65 = vrot.slane %v52, %v64
    %vm66 = vcmask 1041409
    %v67 = vsel %vm66, %v65, %v61
    %vm68 = vcmask 31744
    %v69 = vsel %vm68, %v67, 0
    %v72 = vsel %vm68, %v53, 0
    %74 = vmatprep.subr.mxu0 0.0
    %75 = vmatpush1.xpose.msra.mxu0 %v72
    %76 = vmatprep.subr.mxu0 0.0
    %77 = vmatpush1.xpose.msra.mxu0 0.0
    %78 = vmatprep.subr.mxu0 0.0
    %79 = vmatpush1.xpose.msra.mxu0 0.0
    %80 = vmatprep.subr.mxu0 0.0
    %81 = vmatpush1.xpose.msra.mxu0 0.0
    %82 = vmatprep.subr.mxu0 0.0
    %83 = vmatpush1.xpose.msra.mxu0 0.0
    %84 = vmatprep.subr.mxu0 0.0
    %85 = vmatpush1.xpose.msra.mxu0 0.0
    %86 = vmatprep.subr.mxu0 0.0
    %87 = vmatpush1.xpose.msra.mxu0 0.0
    %88 = vmatprep.subr.mxu0 0.0
    %89 = vmatpush1.xpose.msra.mxu0 0.0
    %90 = vmatprep.subr.mxu0 0.0
    %91 = vmatpush1.xpose.msra.mxu0 0.0
    %92 = vmatprep.subr.mxu0 0.0
    %93 = vmatpush1.xpose.msra.mxu0 0.0
    %94 = vmatprep.subr.mxu0 0.0
    %95 = vmatpush1.xpose.msra.mxu0 0.0
    %96 = vmatprep.subr.mxu0 0.0
    %97 = vmatpush1.xpose.msra.mxu0 0.0
    %98 = vmatprep.subr.mxu0 0.0
    %99 = vmatpush1.xpose.msra.mxu0 0.0
    %100 = vmatprep.subr.mxu0 0.0
    %101 = vmatpush1.xpose.msra.mxu0 0.0
    %102 = vmatprep.subr.mxu0 0.0
    %103 = vmatpush1.xpose.msra.mxu0 0.0
    %104 = vmatprep.subr.mxu0 0.0
    %105 = vmatpush1.xpose.msra.mxu0 0.0
    %106 = vmatprep.subr.mxu0 0.0
    %107 = vmatpush1.xpose.msra.mxu0 0.0
    %108 = vmatprep.subr.mxu0 0.0
    %109 = vmatpush1.xpose.msra.mxu0 0.0
    %110 = vmatprep.subr.mxu0 0.0
    %111 = vmatpush1.xpose.msra.mxu0 0.0
    %112 = vmatprep.subr.mxu0 0.0
    %113 = vmatpush1.xpose.msra.mxu0 0.0
    %114 = vmatprep.subr.mxu0 0.0
    %115 = vmatpush1.xpose.msra.mxu0 0.0
    %116 = vmatprep.subr.mxu0 0.0
    %117 = vmatpush1.xpose.msra.mxu0 0.0
    %118 = vmatprep.subr.mxu0 0.0
    %119 = vmatpush1.xpose.msra.mxu0 0.0
    %120 = vmatprep.subr.mxu0 0.0
    %121 = vmatpush1.xpose.msra.mxu0 0.0
    %122 = vmatprep.subr.mxu0 0.0
    %123 = vmatpush1.xpose.msra.mxu0 0.0
    %124 = vmatprep.subr.mxu0 0.0
    %125 = vmatpush1.xpose.msra.mxu0 0.0
    %126 = vmatprep.subr.mxu0 0.0
    %127 = vmatpush1.xpose.msra.mxu0 0.0
    %128 = vmatprep.subr.mxu0 0.0
    %129 = vmatpush1.xpose.msra.mxu0 0.0
    %130 = vmatprep.subr.mxu0 0.0
    %131 = vmatpush1.xpose.msra.mxu0 0.0
    %132 = vmatprep.subr.mxu0 0.0
    %133 = vmatpush1.xpose.msra.mxu0 0.0
    %134 = vmatprep.subr.mxu0 0.0
    %135 = vmatpush1.xpose.msra.mxu0 0.0
    %136 = vmatprep.subr.mxu0 0.0
    %137 = vmatpush1.xpose.msra.mxu0 0.0
    %138 = vmatprep.mubr.f32.mxu0 0.0
    %139 = vmatmul.mubr.f32.gmra.mrb[0].mxu0 %v69
    %v140 = vpop.f32.mrb[0].mxu0
    %v141 = vadd.f32 0.0, %v140
    %v142 = vpop.f32.mrb[0].mxu0
    %143 = vdwg.mxu0
    %v144 = vld [vmem:[%s2] sm:$0xf]
    %vm145 = vcmask 15360
    %v147 = vsel %vm145, %v141, 0
    %v150 = vsel %vm145, %v144, 0
    %152 = vmatprep.subr.mxu0 0.0
    %153 = vmatpush1.xpose.msra.mxu0 %v150
    %154 = vmatprep.subr.mxu0 0.0
    %155 = vmatpush1.xpose.msra.mxu0 0.0
    %156 = vmatprep.subr.mxu0 0.0
    %157 = vmatpush1.xpose.msra.mxu0 0.0
    %158 = vmatprep.subr.mxu0 0.0
    %159 = vmatpush1.xpose.msra.mxu0 0.0
    %160 = vmatprep.subr.mxu0 0.0
    %161 = vmatpush1.xpose.msra.mxu0 0.0
    %162 = vmatprep.subr.mxu0 0.0
    %163 = vmatpush1.xpose.msra.mxu0 0.0
    %164 = vmatprep.subr.mxu0 0.0
    %165 = vmatpush1.xpose.msra.mxu0 0.0
    %166 = vmatprep.subr.mxu0 0.0
    %167 = vmatpush1.xpose.msra.mxu0 0.0
    %168 = vmatprep.subr.mxu0 0.0
    %169 = vmatpush1.xpose.msra.mxu0 0.0
    %170 = vmatprep.subr.mxu0 0.0
    %171 = vmatpush1.xpose.msra.mxu0 0.0
    %172 = vmatprep.subr.mxu0 0.0
    %173 = vmatpush1.xpose.msra.mxu0 0.0
    %174 = vmatprep.subr.mxu0 0.0
    %175 = vmatpush1.xpose.msra.mxu0 0.0
    %176 = vmatprep.subr.mxu0 0.0
    %177 = vmatpush1.xpose.msra.mxu0 0.0
    %178 = vmatprep.subr.mxu0 0.0
    %179 = vmatpush1.xpose.msra.mxu0 0.0
    %180 = vmatprep.subr.mxu0 0.0
    %181 = vmatpush1.xpose.msra.mxu0 0.0
    %182 = vmatprep.subr.mxu0 0.0
    %183 = vmatpush1.xpose.msra.mxu0 0.0
    %184 = vmatprep.subr.mxu0 0.0
    %185 = vmatpush1.xpose.msra.mxu0 0.0
    %186 = vmatprep.subr.mxu0 0.0
    %187 = vmatpush1.xpose.msra.mxu0 0.0
    %188 = vmatprep.subr.mxu0 0.0
    %189 = vmatpush1.xpose.msra.mxu0 0.0
    %190 = vmatprep.subr.mxu0 0.0
    %191 = vmatpush1.xpose.msra.mxu0 0.0
    %192 = vmatprep.subr.mxu0 0.0
    %193 = vmatpush1.xpose.msra.mxu0 0.0
    %194 = vmatprep.subr.mxu0 0.0
    %195 = vmatpush1.xpose.msra.mxu0 0.0
    %196 = vmatprep.subr.mxu0 0.0
    %197 = vmatpush1.xpose.msra.mxu0 0.0
    %198 = vmatprep.subr.mxu0 0.0
    %199 = vmatpush1.xpose.msra.mxu0 0.0
    %200 = vmatprep.subr.mxu0 0.0
    %201 = vmatpush1.xpose.msra.mxu0 0.0
    %202 = vmatprep.subr.mxu0 0.0
    %203 = vmatpush1.xpose.msra.mxu0 0.0
    %204 = vmatprep.subr.mxu0 0.0
    %205 = vmatpush1.xpose.msra.mxu0 0.0
    %206 = vmatprep.subr.mxu0 0.0
    %207 = vmatpush1.xpose.msra.mxu0 0.0
    %208 = vmatprep.subr.mxu0 0.0
    %209 = vmatpush1.xpose.msra.mxu0 0.0
    %210 = vmatprep.subr.mxu0 0.0
    %211 = vmatpush1.xpose.msra.mxu0 0.0
    %212 = vmatprep.subr.mxu0 0.0
    %213 = vmatpush1.xpose.msra.mxu0 0.0
    %214 = vmatprep.subr.mxu0 0.0
    %215 = vmatpush1.xpose.msra.mxu0 0.0
    %216 = vmatprep.mubr.f32.mxu0 0.0
    %217 = vmatmul.mubr.f32.gmra.mrb[0].mxu0 %v147
    %v218 = vpop.f32.mrb[0].mxu0
    %v219 = vadd.f32 0.0, %v218
    %v220 = vpop.f32.mrb[0].mxu0
    %221 = vdwg.mxu0
    %v222 = vxor.u32 %v219, 2147483648
    %v223 = vmul.f32 %v222, 1.442695
    %v224 = vpow.pop %v223
    %v225 = vadd.f32 %v224, 1.0
    %v226 = vrcp.pop %v225
    %v227 = vmul.f32 1.0, %v226
    %v228 = vlaneseq
    %v229 = vshrl.u32 %v228, 7
    %v230 = vsub.s32 0, %v229
    %v231 = vrot.slane %v227, %v230
    %233 = vbcast.lane.b32.xlu0 %v231, 256
    %v234 = vpop.permute.xlu0 %233
    %v235 = vlaneseq
    %v236 = vshrl.u32 %v235, 7
    %v237 = vsub.s32 1, %v236
    %v238 = vrot.slane %v227, %v237
    %240 = vbcast.lane.b32.xlu0 %v238, 256
    %v241 = vpop.permute.xlu0 %240
    %v242 = vld [vmem:[%s3] sm:$0x1]
    %v243 = vlaneseq
    %v244 = vshrl.u32 %v243, 7
    %v245 = vsub.s32 0, %v244
    %v246 = vrot.slane %v242, %v245
    %248 = vbcast.lane.b32.xlu0 %v246, 256
    %v249 = vpop.permute.xlu0 %248
    %v250 = vmul.f32 %v249, %v32
    %v251 = vmul.f32 %v249, %v36
    %v252 = vmul.f32 %v249, %v33
    %v253 = vmul.f32 %v249, %v37
    %v254 = vsel %vm40, %v250, 0.0
    %v255 = vrot.slane %v254, 4
    %v256 = vadd.f32 %v254, %v255
    %v257 = vrot.slane %v256, 2
    %v258 = vadd.f32 %v256, %v257
    %v259 = vrot.slane %v258, 1
    %v260 = vadd.f32 %v258, %v259
    %v261 = vsel %vm40, %v251, 0.0
    %v262 = vrot.slane %v261, 4
    %v263 = vadd.f32 %v261, %v262
    %v264 = vrot.slane %v263, 2
    %v265 = vadd.f32 %v263, %v264
    %v266 = vrot.slane %v265, 1
    %v267 = vadd.f32 %v265, %v266
    %v268 = vsel %vm40, %v252, 0.0
    %v269 = vrot.slane %v268, 4
    %v270 = vadd.f32 %v268, %v269
    %v271 = vrot.slane %v270, 2
    %v272 = vadd.f32 %v270, %v271
    %v273 = vrot.slane %v272, 1
    %v274 = vadd.f32 %v272, %v273
    %v275 = vsel %vm40, %v253, 0.0
    %v276 = vrot.slane %v275, 4
    %v277 = vadd.f32 %v275, %v276
    %v278 = vrot.slane %v277, 2
    %v279 = vadd.f32 %v277, %v278
    %v280 = vrot.slane %v279, 1
    %v281 = vadd.f32 %v279, %v280
    %v282 = vxor.u32 %v260, 2147483648
    %v283 = vxor.u32 %v267, 2147483648
    %v284 = vxor.u32 %v274, 2147483648
    %v285 = vxor.u32 %v281, 2147483648
    %v286 = vmul.f32 %v282, 1.442695
    %v287 = vpow.pop %v286
    %v288 = vmul.f32 %v283, 1.442695
    %v289 = vpow.pop %v288
    %v290 = vmul.f32 %v284, 1.442695
    %v291 = vpow.pop %v290
    %v292 = vmul.f32 %v285, 1.442695
    %v293 = vpow.pop %v292
    %v294 = vadd.f32 %v287, 1.0
    %v295 = vadd.f32 %v289, 1.0
    %v296 = vadd.f32 %v291, 1.0
    %v297 = vadd.f32 %v293, 1.0
    %v298 = vrcp.pop %v294
    %v299 = vmul.f32 1.0, %v298
    %v300 = vrcp.pop %v295
    %v301 = vmul.f32 1.0, %v300
    %v302 = vrcp.pop %v296
    %v303 = vmul.f32 1.0, %v302
    %v304 = vrcp.pop %v297
    %v305 = vmul.f32 1.0, %v304
    %v306 = vadd.f32 %v234, %v299
    %v307 = vadd.f32 %v234, %v301
    %v308 = vadd.f32 %v241, %v303
    %v309 = vadd.f32 %v241, %v305
    %v314 = vcombine.low %v306, %v307
    %v315 = vcombine.low %v308, %v309
    %v318 = vmul.f32 %v32, %v314
    %v319 = vmul.f32 %v33, %v315
    %320 = vst [vmem:[#allocation5] sm:$0xff] %v318
    %321 = vst [vmem:[#allocation5 + $0x8] sm:$0xff] %v319
    // Predicated region
    $region22: #{tpu_custom_call.1} parent=1 // pred_check
      _
    $region23: #{tpu_custom_call.1} parent=1 // pred_check_branch
      %323 = sbr.rel (0) target = $region25
    $region24: #{tpu_custom_call.1} parent=1 // pred_region
      %s325 = ssub.s32 256, 256
      %326 = vsyncadd [#allocation4], %s325
      %s327 = sshll.u32 [#allocation5], 4
      %s328 = int_to_ptr.vmem [resolvable:$true] %s327
      %333 = dma.vmem_to_hbm [thread:$0]  %s328, 256, %s4, [#allocation4], 128, 128, 8
    $region25: #{tpu_custom_call.1} parent=1 // pred_fallthru
      _
    // Predicated region
    $region26: #{tpu_custom_call.1} parent=1 // pred_check
      _
    $region27: #{tpu_custom_call.1} parent=1 // pred_check_branch
      %335 = sbr.rel (0) target = $region29
    $region28: #{tpu_custom_call.1} parent=1 // pred_region
      %336 = dma.done [#allocation4], 256
    $region29: #{tpu_custom_call.1} parent=1 // pred_fallthru
      _
    %337 = vsyncpa [#allocation3], 1
    %338 = vsyncpa [#allocation4], 1

</llo_original>
